<compile_context>
chip_gen: v7x
topology: tpu7x:2x2x1
jax: 0.10.0
libtpu: 0.0.40
codegen_flags: <defaults>
</compile_context>

<pallas_src>
import jax
import jax.numpy as jnp
from jax.experimental import pallas as pl
from jax.experimental.pallas import tpu as pltpu


def generator_kernel(x_ref, w1_ref, b1_ref, w2_ref, b2_ref, w3_ref, b3_ref, o_ref):
    x = x_ref[...]                                                   # (4, TB)
    # Layer 1: (24,4) @ (4,TB) + b1, ReLU   (rows 20..23 are zero padding)
    h1 = jnp.dot(w1_ref[...], x, preferred_element_type=jnp.float32)
    h1 = jnp.maximum(h1 + b1_ref[...], 0.0)                         # (24, TB) f32
    # Layer 2: (16,24) @ (24,TB) + b2, ReLU (rows 10..15 are zero padding)
    h2 = jnp.dot(w2_ref[...], h1.astype(w2_ref.dtype),
                 preferred_element_type=jnp.float32)
    h2 = jnp.maximum(h2 + b2_ref[...], 0.0)                         # (16, TB) f32
    # Layer 3: (2,16) @ (16,TB) + b3, no activation
    h3 = jnp.dot(w3_ref[...], h2.astype(w3_ref.dtype),
                 preferred_element_type=jnp.float32)
    o_ref[...] = (h3 + b3_ref[...]).astype(o_ref.dtype)             # (2, TB) lane-dense


def _pad_params(params, compute_dtype):
    """Zero-pad hidden dims 20->24 and 10->16 (sublane multiples of 8).

    Zero rows/cols/biases keep the math bit-identical: padded h1/h2 rows are
    ReLU(0)=0 and the matching weight columns in the next layer are zero.
    """
    H1, H2 = 24, 16
    w1p = jnp.zeros((H1, 4), compute_dtype).at[:20, :].set(
        params["w1"].astype(compute_dtype))
    b1p = jnp.zeros((H1, 1), jnp.float32).at[:20, 0].set(
        params["b1"].astype(jnp.float32))
    w2p = jnp.zeros((H2, H1), compute_dtype).at[:10, :20].set(
        params["w2"].astype(compute_dtype))
    b2p = jnp.zeros((H2, 1), jnp.float32).at[:10, 0].set(
        params["b2"].astype(jnp.float32))
    w3p = jnp.zeros((2, H2), compute_dtype).at[:, :10].set(
        params["w3"].astype(compute_dtype))
    b3p = params["b3"].reshape(2, 1).astype(jnp.float32)
    return w1p, b1p, w2p, b2p, w3p, b3p


def _pick_batch_tile(B, tb_max):
    """Batch tile: multiple of 128, as large as requested, >=2 grid steps when
    the batch is big enough (so v7x's 2 TensorCores both get work)."""
    bp128 = pl.cdiv(B, 128) * 128
    tb = max(128, (min(tb_max, bp128) // 128) * 128)
    if pl.cdiv(B, tb) < 2 and bp128 >= 256:
        tb = pl.cdiv(bp128 // 2, 128) * 128
    return tb


def generator_forward_t(x_t, params, *, tb=32768, compute_dtype=jnp.bfloat16):
    """Transposed interface (preferred): x_t is (4, B), returns (2, B) float32.

    Using this directly (keeping activations batch-on-lanes across layers /
    callers) avoids all wrapper-side HBM transpose passes.
    NOTE: tiles beyond ~65536 need pltpu.CompilerParams(vmem_limit_bytes=...),
    especially on v5e (16 MiB default scoped VMEM).
    """
    f_in, B = x_t.shape
    assert f_in == 4, f"expected (4, B) input, got {x_t.shape}"
    w1, b1, w2, b2, w3, b3 = _pad_params(params, compute_dtype)
    x_t = x_t.astype(compute_dtype)

    tb = _pick_batch_tile(B, tb)
    n_tiles = pl.cdiv(B, tb)          # ragged last block handled by Pallas

    const = lambda a: pl.BlockSpec(a.shape, lambda i: (0, 0))  # fetched once, VMEM-resident

    out_t = pl.pallas_call(
        generator_kernel,
        out_shape=jax.ShapeDtypeStruct((2, B), jnp.float32),
        grid=(n_tiles,),
        in_specs=[
            # x: streamed + double-buffered along the batch (lane) axis.
            # (If a profile ever shows exposed DMA at step boundaries, add
            #  pipeline_mode=pl.Buffered(3) here.)
            pl.BlockSpec((4, tb), lambda i: (0, i)),
            const(w1), const(b1),
            const(w2), const(b2),
            const(w3), const(b3),
        ],
        out_specs=pl.BlockSpec((2, tb), lambda i: (0, i)),
        compiler_params=pltpu.CompilerParams(
            dimension_semantics=("parallel",)),   # batch axis shards over v7x's 2 TCs
    )(x_t, w1, b1, w2, b2, w3, b3)
    return out_t


def generator_forward(x, params, *, tb=32768, compute_dtype=jnp.bfloat16):
    """PyTorch-shaped interface: x (B, 4) -> (B, 2) float32.

    Casts before transposing so the (un-fused) XLA transpose moves the
    narrower dtype; prefer `generator_forward_t` when the caller can keep the
    batch-on-lanes layout end to end.
    """
    x_t = x.astype(compute_dtype).T                      # (4, B)
    out_t = generator_forward_t(x_t, params, tb=tb, compute_dtype=compute_dtype)
    return out_t.T                                       # (B, 2)


def init_params(key):
    """Deterministic init mimicking nn.Linear default (uniform +/- 1/sqrt(fan_in))."""
    dims = [(20, 4), (10, 20), (2, 10)]  # PyTorch (out_features, in_features)
    params = {}
    for i, (out_f, in_f) in enumerate(dims, start=1):
        key, kw, kb = jax.random.split(key, 3)
        bound = 1.0 / jnp.sqrt(in_f)
        params[f"w{i}"] = jax.random.uniform(
            kw, (out_f, in_f), jnp.float32, minval=-bound, maxval=bound)
        params[f"b{i}"] = jax.random.uniform(
            kb, (out_f,), jnp.float32, minval=-bound, maxval=bound)
    return params


def reference_forward(x, params):
    h = jnp.maximum(x @ params["w1"].T + params["b1"], 0.0)
    h = jnp.maximum(h @ params["w2"].T + params["b2"], 0.0)
    return h @ params["w3"].T + params["b3"]


if __name__ == "__main__":
    key = jax.random.PRNGKey(0)
    kx, kx2, kp = jax.random.split(key, 3)
    params = init_params(kp)

    # 1) Small batch (single ragged tile, 8 columns on a 128-lane block), exact f32.
    B = 8
    x = jax.random.normal(kx, (B, 4), jnp.float32)
    out = jax.block_until_ready(
        generator_forward(x, params, compute_dtype=jnp.float32))
    ref = reference_forward(x, params)
    assert out.shape == (B, 2), out.shape
    assert jnp.allclose(out, ref, atol=1e-5, rtol=1e-5), "mismatch (B=8, f32)"

    # 2) Multi-tile + ragged last block (B=300, tb=128 -> 3 grid steps), exact f32,
    #    via the transposed (no-wrapper-transpose) entry point.
    B2 = 300
    x2 = jax.random.normal(kx2, (B2, 4), jnp.float32)
    out2_t = jax.block_until_ready(
        generator_forward_t(x2.T, params, tb=128, compute_dtype=jnp.float32))
    ref2 = reference_forward(x2, params)
    assert out2_t.shape == (2, B2), out2_t.shape
    assert jnp.allclose(out2_t.T, ref2, atol=1e-5, rtol=1e-5), "mismatch (B=300, f32)"

    # 3) Default bf16 streaming path (f32 accumulation), looser tolerance; also
    #    exercises the >=2-grid-step split heuristic (bp128=384 -> tb=256, 2 steps).
    out3 = jax.block_until_ready(generator_forward(x2, params))
    assert out3.shape == (B2, 2), out3.shape
    assert jnp.allclose(out3, ref2, atol=5e-2, rtol=5e-2), "mismatch (B=300, bf16)"

    print("KERNEL_OK")
</pallas_src>

<mosaic_0001>
module attributes {stable_mosaic.version = 11 : i64} {
  func.func @generator_kernel(%arg0: i32, %arg1: memref<4x128xf32, #tpu.memory_space<vmem>>, %arg2: memref<24x4xf32, #tpu.memory_space<vmem>>, %arg3: memref<24x1xf32, #tpu.memory_space<vmem>>, %arg4: memref<16x24xf32, #tpu.memory_space<vmem>>, %arg5: memref<16x1xf32, #tpu.memory_space<vmem>>, %arg6: memref<2x16xf32, #tpu.memory_space<vmem>>, %arg7: memref<2x1xf32, #tpu.memory_space<vmem>>, %arg8: memref<2x128xf32, #tpu.memory_space<vmem>>) attributes {dimension_semantics = [#tpu.dimension_semantics<parallel>], iteration_bounds = array<i64: 1>, scalar_prefetch = 0 : i64, scratch_operands = 0 : i64, tpu.core_type = #tpu.core_type<tc>, window_params = [{transform_indices = @transform_0, window_bounds = array<i64: 4, 128>}, {pipeline_mode = #tpu.pipeline_mode<synchronous>, transform_indices = @transform_1, window_bounds = array<i64: 24, 4>}, {pipeline_mode = #tpu.pipeline_mode<synchronous>, transform_indices = @transform_2, window_bounds = array<i64: 24, 1>}, {pipeline_mode = #tpu.pipeline_mode<synchronous>, transform_indices = @transform_3, window_bounds = array<i64: 16, 24>}, {pipeline_mode = #tpu.pipeline_mode<synchronous>, transform_indices = @transform_4, window_bounds = array<i64: 16, 1>}, {pipeline_mode = #tpu.pipeline_mode<synchronous>, transform_indices = @transform_5, window_bounds = array<i64: 2, 16>}, {pipeline_mode = #tpu.pipeline_mode<synchronous>, transform_indices = @transform_6, window_bounds = array<i64: 2, 1>}, {transform_indices = @transform_7, window_bounds = array<i64: 2, 128>}]} {
    %c0 = arith.constant 0 : index
    %c0_0 = arith.constant 0 : index
    %0 = vector.load %arg1[%c0, %c0_0] : memref<4x128xf32, #tpu.memory_space<vmem>>, vector<4x128xf32>
    %c0_1 = arith.constant 0 : index
    %c0_2 = arith.constant 0 : index
    %1 = vector.load %arg2[%c0_1, %c0_2] : memref<24x4xf32, #tpu.memory_space<vmem>>, vector<24x4xf32>
    %cst = arith.constant dense<0.000000e+00> : vector<24x128xf32>
    %2 = tpu.matmul %1, %0, %cst {dimension_numbers = #tpu.dot_dimension_numbers<[1], [0], [0], [1], [0, 0, 1, 1], [], []>} : vector<24x4xf32>, vector<4x128xf32>, vector<24x128xf32> -> vector<24x128xf32>
    %c0_3 = arith.constant 0 : index
    %c0_4 = arith.constant 0 : index
    %3 = vector.load %arg3[%c0_3, %c0_4] : memref<24x1xf32, #tpu.memory_space<vmem>>, vector<24x1xf32>
    %4 = vector.broadcast %3 : vector<24x1xf32> to vector<24x128xf32>
    %5 = arith.addf %2, %4 : vector<24x128xf32>
    %cst_5 = arith.constant 0.000000e+00 : f32
    %6 = vector.broadcast %cst_5 : f32 to vector<24x128xf32>
    %7 = arith.maximumf %5, %6 : vector<24x128xf32>
    %c0_6 = arith.constant 0 : index
    %c0_7 = arith.constant 0 : index
    %8 = vector.load %arg4[%c0_6, %c0_7] : memref<16x24xf32, #tpu.memory_space<vmem>>, vector<16x24xf32>
    %cst_8 = arith.constant dense<0.000000e+00> : vector<16x128xf32>
    %9 = tpu.matmul %8, %7, %cst_8 {dimension_numbers = #tpu.dot_dimension_numbers<[1], [0], [0], [1], [0, 0, 1, 1], [], []>} : vector<16x24xf32>, vector<24x128xf32>, vector<16x128xf32> -> vector<16x128xf32>
    %c0_9 = arith.constant 0 : index
    %c0_10 = arith.constant 0 : index
    %10 = vector.load %arg5[%c0_9, %c0_10] : memref<16x1xf32, #tpu.memory_space<vmem>>, vector<16x1xf32>
    %11 = vector.broadcast %10 : vector<16x1xf32> to vector<16x128xf32>
    %12 = arith.addf %9, %11 : vector<16x128xf32>
    %cst_11 = arith.constant 0.000000e+00 : f32
    %13 = vector.broadcast %cst_11 : f32 to vector<16x128xf32>
    %14 = arith.maximumf %12, %13 : vector<16x128xf32>
    %c0_12 = arith.constant 0 : index
    %c0_13 = arith.constant 0 : index
    %15 = vector.load %arg6[%c0_12, %c0_13] : memref<2x16xf32, #tpu.memory_space<vmem>>, vector<2x16xf32>
    %cst_14 = arith.constant dense<0.000000e+00> : vector<2x128xf32>
    %16 = tpu.matmul %15, %14, %cst_14 {dimension_numbers = #tpu.dot_dimension_numbers<[1], [0], [0], [1], [0, 0, 1, 1], [], []>} : vector<2x16xf32>, vector<16x128xf32>, vector<2x128xf32> -> vector<2x128xf32>
    %c0_15 = arith.constant 0 : index
    %c0_16 = arith.constant 0 : index
    %17 = vector.load %arg7[%c0_15, %c0_16] : memref<2x1xf32, #tpu.memory_space<vmem>>, vector<2x1xf32>
    %18 = vector.broadcast %17 : vector<2x1xf32> to vector<2x128xf32>
    %19 = arith.addf %16, %18 : vector<2x128xf32>
    %c0_17 = arith.constant 0 : index
    %c0_18 = arith.constant 0 : index
    %20 = vector.load %arg8[%c0_17, %c0_18] : memref<2x128xf32, #tpu.memory_space<vmem>>, vector<2x128xf32>
    tpu.vector_store %arg8[%c0_17, %c0_18], %19 {strides = array<i32>} : memref<2x128xf32, #tpu.memory_space<vmem>>, vector<2x128xf32>,
    return
  }
  func.func @transform_0(%arg0: i32) -> (i32, i32) {
    %c0_i32 = arith.constant 0 : i32
    %c0_i32_0 = arith.constant 0 : i32
    return %c0_i32, %arg0 : i32, i32
  }
  func.func @transform_1(%arg0: i32) -> (i32, i32) {
    %c0_i32 = arith.constant 0 : i32
    %c0_i32_0 = arith.constant 0 : i32
    %c0_i32_1 = arith.constant 0 : i32
    return %c0_i32, %c0_i32_0 : i32, i32
  }
  func.func @transform_2(%arg0: i32) -> (i32, i32) {
    %c0_i32 = arith.constant 0 : i32
    %c0_i32_0 = arith.constant 0 : i32
    %c0_i32_1 = arith.constant 0 : i32
    return %c0_i32, %c0_i32_0 : i32, i32
  }
  func.func @transform_3(%arg0: i32) -> (i32, i32) {
    %c0_i32 = arith.constant 0 : i32
    %c0_i32_0 = arith.constant 0 : i32
    %c0_i32_1 = arith.constant 0 : i32
    return %c0_i32, %c0_i32_0 : i32, i32
  }
  func.func @transform_4(%arg0: i32) -> (i32, i32) {
    %c0_i32 = arith.constant 0 : i32
    %c0_i32_0 = arith.constant 0 : i32
    %c0_i32_1 = arith.constant 0 : i32
    return %c0_i32, %c0_i32_0 : i32, i32
  }
  func.func @transform_5(%arg0: i32) -> (i32, i32) {
    %c0_i32 = arith.constant 0 : i32
    %c0_i32_0 = arith.constant 0 : i32
    %c0_i32_1 = arith.constant 0 : i32
    return %c0_i32, %c0_i32_0 : i32, i32
  }
  func.func @transform_6(%arg0: i32) -> (i32, i32) {
    %c0_i32 = arith.constant 0 : i32
    %c0_i32_0 = arith.constant 0 : i32
    %c0_i32_1 = arith.constant 0 : i32
    return %c0_i32, %c0_i32_0 : i32, i32
  }
  func.func @transform_7(%arg0: i32) -> (i32, i32) {
    %c0_i32 = arith.constant 0 : i32
    %c0_i32_0 = arith.constant 0 : i32
    return %c0_i32, %arg0 : i32, i32
  }
}

</mosaic_0001>

<llo_original>
// kernel: tpu_custom_call.1
$region0: #{tpu_custom_call.1}
  #allocation0 [shape = 'u32[]', space=smem, size = 0x4, offset = 0x4, fixed_abs, tag = 'smem constant byte address 0x4 - core index']
  #allocation1 [shape = 'u32[144,128]{1,0:T(1,128)}', space=vmem, size = 0x12000, scoped, tag = 'internal scratch']
  %s0 = inlined_call_operand.vmem [shape: f32[4,8], index: 0, kind: input, shape index: {}]
  %s1 = inlined_call_operand.vmem [shape: f32[24,4], index: 1, kind: input, shape index: {}]
  %s2 = inlined_call_operand.vmem [shape: f32[24,1], index: 2, kind: input, shape index: {}]
  %s3 = inlined_call_operand.vmem [shape: f32[16,24], index: 3, kind: input, shape index: {}]
  %s4 = inlined_call_operand.vmem [shape: f32[16,1], index: 4, kind: input, shape index: {}]
  %s5 = inlined_call_operand.vmem [shape: f32[2,16], index: 5, kind: input, shape index: {}]
  %s6 = inlined_call_operand.vmem [shape: f32[2,1], index: 6, kind: input, shape index: {}]
  %s7 = inlined_call_operand.hbm [shape: f32[2,8], index: 7, kind: output, shape index: {}]
  %s8 = sld [smem:[#allocation0]]
  $region38: #{tpu_custom_call.1} parent=0
    _
  %s10 = ssub.s32 1, %s8
  %s11 = scalar_select 0, %s10, %s8
  $region1: #{tpu_custom_call.1} parent=0
    #allocation2 [shape = 'u8[1024]{0}', space=vmem, size = 0x400, scoped, tag = 'output window, operand 0, single buffered']
    #allocation3 [shape = 's32[1]{0}', space=sflag, size = 0x4, scoped, tag = 'scoped memory for tpu_custom_call.1']
    %12 = vsyncpa [#allocation3], 0
    // Predicated region
    $region2: #{tpu_custom_call.1} parent=1 // pred_check
      _
    $region3: #{tpu_custom_call.1} parent=1 // pred_check_branch
      %14 = sbr.rel (0) target = $region5
    $region4: #{tpu_custom_call.1} parent=1 // pred_region
      _
    $region5: #{tpu_custom_call.1} parent=1 // pred_fallthru
      _
    // Predicated region
    $region6: #{tpu_custom_call.1} parent=1 // pred_check
      _
    $region7: #{tpu_custom_call.1} parent=1 // pred_check_branch
      %16 = sbr.rel (0) target = $region9
    $region8: #{tpu_custom_call.1} parent=1 // pred_region
      _
    $region9: #{tpu_custom_call.1} parent=1 // pred_fallthru
      _
    // Predicated region
    $region10: #{tpu_custom_call.1} parent=1 // pred_check
      _
    $region11: #{tpu_custom_call.1} parent=1 // pred_check_branch
      %18 = sbr.rel (0) target = $region13
    $region12: #{tpu_custom_call.1} parent=1 // pred_region
      _
    $region13: #{tpu_custom_call.1} parent=1 // pred_fallthru
      _
    // Predicated region
    $region14: #{tpu_custom_call.1} parent=1 // pred_check
      _
    $region15: #{tpu_custom_call.1} parent=1 // pred_check_branch
      %20 = sbr.rel (0) target = $region17
    $region16: #{tpu_custom_call.1} parent=1 // pred_region
      _
    $region17: #{tpu_custom_call.1} parent=1 // pred_fallthru
      _
    // Predicated region
    $region18: #{tpu_custom_call.1} parent=1 // pred_check
      _
    $region19: #{tpu_custom_call.1} parent=1 // pred_check_branch
      %22 = sbr.rel (0) target = $region21
    $region20: #{tpu_custom_call.1} parent=1 // pred_region
      _
    $region21: #{tpu_custom_call.1} parent=1 // pred_fallthru
      _
    // Predicated region
    $region22: #{tpu_custom_call.1} parent=1 // pred_check
      _
    $region23: #{tpu_custom_call.1} parent=1 // pred_check_branch
      %24 = sbr.rel (0) target = $region25
    $region24: #{tpu_custom_call.1} parent=1 // pred_region
      _
    $region25: #{tpu_custom_call.1} parent=1 // pred_fallthru
      _
    // Predicated region
    $region26: #{tpu_custom_call.1} parent=1 // pred_check
      _
    $region27: #{tpu_custom_call.1} parent=1 // pred_check_branch
      %26 = sbr.rel (0) target = $region29
    $region28: #{tpu_custom_call.1} parent=1 // pred_region
      _
    $region29: #{tpu_custom_call.1} parent=1 // pred_fallthru
      _
    %v27 = vld [vmem:[%s0] sm:$0xf]
    %v28 = vld [vmem:[%s1] sm:$0xff]
    %v29 = vld [vmem:[%s1 + $0x8] sm:$0xff]
    %v30 = vld [vmem:[%s1 + $0x10] sm:$0xff]
    %v31 = vld [vmem:[%s2] sm:$0xff]
    %v32 = vld [vmem:[%s2 + $0x8] sm:$0xff]
    %v33 = vld [vmem:[%s2 + $0x10] sm:$0xff]
    %35 = vset.pattern.permute.xlu0 0
    %36 = vperm.xlu0 %35, %v31
    %v37 = vpop.permute.xlu0 %36
    %40 = vset.pattern.permute.xlu0 0
    %41 = vperm.xlu0 %40, %v32
    %v42 = vpop.permute.xlu0 %41
    %45 = vset.pattern.permute.xlu0 0
    %46 = vperm.xlu0 %45, %v33
    %v47 = vpop.permute.xlu0 %46
    %vm49 = vcmask 31744
    %v51 = vsel %vm49, %v28, 0
    %v54 = vsel %vm49, %v29, 0
    %v57 = vsel %vm49, %v30, 0
    %vm59 = vcmask 1043456
    %v61 = vsel %vm59, %v27, 0
    %63 = vmatprep.subr.mxu0 0.0
    %64 = vmatpush1.msra.mxu0 %v61
    %65 = vmatprep.subr.mxu0 0.0
    %66 = vmatpush1.msra.mxu0 0.0
    %67 = vmatprep.subr.mxu0 0.0
    %68 = vmatpush1.msra.mxu0 0.0
    %69 = vmatprep.subr.mxu0 0.0
    %70 = vmatpush1.msra.mxu0 0.0
    %71 = vmatprep.subr.mxu0 0.0
    %72 = vmatpush1.msra.mxu0 0.0
    %73 = vmatprep.subr.mxu0 0.0
    %74 = vmatpush1.msra.mxu0 0.0
    %75 = vmatprep.subr.mxu0 0.0
    %76 = vmatpush1.msra.mxu0 0.0
    %77 = vmatprep.subr.mxu0 0.0
    %78 = vmatpush1.msra.mxu0 0.0
    %79 = vmatprep.subr.mxu0 0.0
    %80 = vmatpush1.msra.mxu0 0.0
    %81 = vmatprep.subr.mxu0 0.0
    %82 = vmatpush1.msra.mxu0 0.0
    %83 = vmatprep.subr.mxu0 0.0
    %84 = vmatpush1.msra.mxu0 0.0
    %85 = vmatprep.subr.mxu0 0.0
    %86 = vmatpush1.msra.mxu0 0.0
    %87 = vmatprep.subr.mxu0 0.0
    %88 = vmatpush1.msra.mxu0 0.0
    %89 = vmatprep.subr.mxu0 0.0
    %90 = vmatpush1.msra.mxu0 0.0
    %91 = vmatprep.subr.mxu0 0.0
    %92 = vmatpush1.msra.mxu0 0.0
    %93 = vmatprep.subr.mxu0 0.0
    %94 = vmatpush1.msra.mxu0 0.0
    %95 = vmatprep.subr.mxu0 0.0
    %96 = vmatpush1.msra.mxu0 0.0
    %97 = vmatprep.subr.mxu0 0.0
    %98 = vmatpush1.msra.mxu0 0.0
    %99 = vmatprep.subr.mxu0 0.0
    %100 = vmatpush1.msra.mxu0 0.0
    %101 = vmatprep.subr.mxu0 0.0
    %102 = vmatpush1.msra.mxu0 0.0
    %103 = vmatprep.subr.mxu0 0.0
    %104 = vmatpush1.msra.mxu0 0.0
    %105 = vmatprep.subr.mxu0 0.0
    %106 = vmatpush1.msra.mxu0 0.0
    %107 = vmatprep.subr.mxu0 0.0
    %108 = vmatpush1.msra.mxu0 0.0
    %109 = vmatprep.subr.mxu0 0.0
    %110 = vmatpush1.msra.mxu0 0.0
    %111 = vmatprep.subr.mxu0 0.0
    %112 = vmatpush1.msra.mxu0 0.0
    %113 = vmatprep.subr.mxu0 0.0
    %114 = vmatpush1.msra.mxu0 0.0
    %115 = vmatprep.subr.mxu0 0.0
    %116 = vmatpush1.msra.mxu0 0.0
    %117 = vmatprep.subr.mxu0 0.0
    %118 = vmatpush1.msra.mxu0 0.0
    %119 = vmatprep.subr.mxu0 0.0
    %120 = vmatpush1.msra.mxu0 0.0
    %121 = vmatprep.subr.mxu0 0.0
    %122 = vmatpush1.msra.mxu0 0.0
    %123 = vmatprep.subr.mxu0 0.0
    %124 = vmatpush1.msra.mxu0 0.0
    %125 = vmatprep.subr.mxu0 0.0
    %126 = vmatpush1.msra.mxu0 0.0
    %127 = vmatprep.mubr.f32.mxu0 0.0
    %128 = vmatmul.mubr.f32.gmra.mrb[0].mxu0 %v51
    %v129 = vpop.f32.mrb[0].mxu0
    %v130 = vadd.f32 %v37, %v129
    %v131 = vpop.f32.mrb[0].mxu0
    %132 = vmatprep.mubr.f32.mxu0 0.0
    %133 = vmatmul.mubr.f32.gmra.mrb[0].mxu0 %v54
    %v134 = vpop.f32.mrb[0].mxu0
    %v135 = vadd.f32 %v42, %v134
    %v136 = vpop.f32.mrb[0].mxu0
    %137 = vmatprep.mubr.f32.mxu0 0.0
    %138 = vmatmul.mubr.f32.gmra.mrb[0].mxu0 %v57
    %v139 = vpop.f32.mrb[0].mxu0
    %v140 = vadd.f32 %v47, %v139
    %v141 = vpop.f32.mrb[0].mxu0
    %142 = vdwg.mxu0
    %v143 = vmax.f32 %v130, 0.0
    %v144 = vmax.f32 %v135, 0.0
    %v145 = vmax.f32 %v140, 0.0
    %v146 = vld [vmem:[%s3] sm:$0xff]
    %v147 = vld [vmem:[%s3 + $0x8] sm:$0xff]
    %v148 = vld [vmem:[%s4] sm:$0xff]
    %v149 = vld [vmem:[%s4 + $0x8] sm:$0xff]
    %151 = vset.pattern.permute.xlu0 0
    %152 = vperm.xlu0 %151, %v148
    %v153 = vpop.permute.xlu0 %152
    %156 = vset.pattern.permute.xlu0 0
    %157 = vperm.xlu0 %156, %v149
    %v158 = vpop.permute.xlu0 %157
    %vm160 = vcmask 195584
    %v162 = vsel %vm160, %v146, 0
    %v165 = vsel %vm160, %v147, 0
    %167 = vmatprep.subr.mxu0 0.0
    %168 = vmatpush1.msra.mxu0 %v143
    %169 = vmatprep.subr.mxu0 0.0
    %170 = vmatpush1.msra.mxu0 %v144
    %171 = vmatprep.subr.mxu0 0.0
    %172 = vmatpush1.msra.mxu0 %v145
    %173 = vmatprep.subr.mxu0 0.0
    %174 = vmatpush1.msra.mxu0 0.0
    %175 = vmatprep.subr.mxu0 0.0
    %176 = vmatpush1.msra.mxu0 0.0
    %177 = vmatprep.subr.mxu0 0.0
    %178 = vmatpush1.msra.mxu0 0.0
    %179 = vmatprep.subr.mxu0 0.0
    %180 = vmatpush1.msra.mxu0 0.0
    %181 = vmatprep.subr.mxu0 0.0
    %182 = vmatpush1.msra.mxu0 0.0
    %183 = vmatprep.subr.mxu0 0.0
    %184 = vmatpush1.msra.mxu0 0.0
    %185 = vmatprep.subr.mxu0 0.0
    %186 = vmatpush1.msra.mxu0 0.0
    %187 = vmatprep.subr.mxu0 0.0
    %188 = vmatpush1.msra.mxu0 0.0
    %189 = vmatprep.subr.mxu0 0.0
    %190 = vmatpush1.msra.mxu0 0.0
    %191 = vmatprep.subr.mxu0 0.0
    %192 = vmatpush1.msra.mxu0 0.0
    %193 = vmatprep.subr.mxu0 0.0
    %194 = vmatpush1.msra.mxu0 0.0
    %195 = vmatprep.subr.mxu0 0.0
    %196 = vmatpush1.msra.mxu0 0.0
    %197 = vmatprep.subr.mxu0 0.0
    %198 = vmatpush1.msra.mxu0 0.0
    %199 = vmatprep.subr.mxu0 0.0
    %200 = vmatpush1.msra.mxu0 0.0
    %201 = vmatprep.subr.mxu0 0.0
    %202 = vmatpush1.msra.mxu0 0.0
    %203 = vmatprep.subr.mxu0 0.0
    %204 = vmatpush1.msra.mxu0 0.0
    %205 = vmatprep.subr.mxu0 0.0
    %206 = vmatpush1.msra.mxu0 0.0
    %207 = vmatprep.subr.mxu0 0.0
    %208 = vmatpush1.msra.mxu0 0.0
    %209 = vmatprep.subr.mxu0 0.0
    %210 = vmatpush1.msra.mxu0 0.0
    %211 = vmatprep.subr.mxu0 0.0
    %212 = vmatpush1.msra.mxu0 0.0
    %213 = vmatprep.subr.mxu0 0.0
    %214 = vmatpush1.msra.mxu0 0.0
    %215 = vmatprep.subr.mxu0 0.0
    %216 = vmatpush1.msra.mxu0 0.0
    %217 = vmatprep.subr.mxu0 0.0
    %218 = vmatpush1.msra.mxu0 0.0
    %219 = vmatprep.subr.mxu0 0.0
    %220 = vmatpush1.msra.mxu0 0.0
    %221 = vmatprep.subr.mxu0 0.0
    %222 = vmatpush1.msra.mxu0 0.0
    %223 = vmatprep.subr.mxu0 0.0
    %224 = vmatpush1.msra.mxu0 0.0
    %225 = vmatprep.subr.mxu0 0.0
    %226 = vmatpush1.msra.mxu0 0.0
    %227 = vmatprep.subr.mxu0 0.0
    %228 = vmatpush1.msra.mxu0 0.0
    %229 = vmatprep.subr.mxu0 0.0
    %230 = vmatpush1.msra.mxu0 0.0
    %231 = vmatprep.mubr.f32.mxu0 0.0
    %232 = vmatmul.mubr.f32.gmra.mrb[0].mxu0 %v162
    %v233 = vpop.f32.mrb[0].mxu0
    %v234 = vadd.f32 %v153, %v233
    %v235 = vpop.f32.mrb[0].mxu0
    %236 = vmatprep.mubr.f32.mxu0 0.0
    %237 = vmatmul.mubr.f32.gmra.mrb[0].mxu0 %v165
    %v238 = vpop.f32.mrb[0].mxu0
    %v239 = vadd.f32 %v158, %v238
    %v240 = vpop.f32.mrb[0].mxu0
    %241 = vdwg.mxu0
    %v242 = vmax.f32 %v234, 0.0
    %v243 = vmax.f32 %v239, 0.0
    %v244 = vld [vmem:[%s5] sm:$0x3]
    %v245 = vld [vmem:[%s6] sm:$0x3]
    %247 = vset.pattern.permute.xlu0 0
    %248 = vperm.xlu0 %247, %v245
    %v249 = vpop.permute.xlu0 %248
    %vm251 = vcmask 130048
    %v253 = vsel %vm251, %v244, 0
    %255 = vmatprep.subr.mxu0 0.0
    %256 = vmatpush1.msra.mxu0 %v242
    %257 = vmatprep.subr.mxu0 0.0
    %258 = vmatpush1.msra.mxu0 %v243
    %259 = vmatprep.subr.mxu0 0.0
    %260 = vmatpush1.msra.mxu0 0.0
    %261 = vmatprep.subr.mxu0 0.0
    %262 = vmatpush1.msra.mxu0 0.0
    %263 = vmatprep.subr.mxu0 0.0
    %264 = vmatpush1.msra.mxu0 0.0
    %265 = vmatprep.subr.mxu0 0.0
    %266 = vmatpush1.msra.mxu0 0.0
    %267 = vmatprep.subr.mxu0 0.0
    %268 = vmatpush1.msra.mxu0 0.0
    %269 = vmatprep.subr.mxu0 0.0
    %270 = vmatpush1.msra.mxu0 0.0
    %271 = vmatprep.subr.mxu0 0.0
    %272 = vmatpush1.msra.mxu0 0.0
    %273 = vmatprep.subr.mxu0 0.0
    %274 = vmatpush1.msra.mxu0 0.0
    %275 = vmatprep.subr.mxu0 0.0
    %276 = vmatpush1.msra.mxu0 0.0
    %277 = vmatprep.subr.mxu0 0.0
    %278 = vmatpush1.msra.mxu0 0.0
    %279 = vmatprep.subr.mxu0 0.0
    %280 = vmatpush1.msra.mxu0 0.0
    %281 = vmatprep.subr.mxu0 0.0
    %282 = vmatpush1.msra.mxu0 0.0
    %283 = vmatprep.subr.mxu0 0.0
    %284 = vmatpush1.msra.mxu0 0.0
    %285 = vmatprep.subr.mxu0 0.0
    %286 = vmatpush1.msra.mxu0 0.0
    %287 = vmatprep.subr.mxu0 0.0
    %288 = vmatpush1.msra.mxu0 0.0
    %289 = vmatprep.subr.mxu0 0.0
    %290 = vmatpush1.msra.mxu0 0.0
    %291 = vmatprep.subr.mxu0 0.0
    %292 = vmatpush1.msra.mxu0 0.0
    %293 = vmatprep.subr.mxu0 0.0
    %294 = vmatpush1.msra.mxu0 0.0
    %295 = vmatprep.subr.mxu0 0.0
    %296 = vmatpush1.msra.mxu0 0.0
    %297 = vmatprep.subr.mxu0 0.0
    %298 = vmatpush1.msra.mxu0 0.0
    %299 = vmatprep.subr.mxu0 0.0
    %300 = vmatpush1.msra.mxu0 0.0
    %301 = vmatprep.subr.mxu0 0.0
    %302 = vmatpush1.msra.mxu0 0.0
    %303 = vmatprep.subr.mxu0 0.0
    %304 = vmatpush1.msra.mxu0 0.0
    %305 = vmatprep.subr.mxu0 0.0
    %306 = vmatpush1.msra.mxu0 0.0
    %307 = vmatprep.subr.mxu0 0.0
    %308 = vmatpush1.msra.mxu0 0.0
    %309 = vmatprep.subr.mxu0 0.0
    %310 = vmatpush1.msra.mxu0 0.0
    %311 = vmatprep.subr.mxu0 0.0
    %312 = vmatpush1.msra.mxu0 0.0
    %313 = vmatprep.subr.mxu0 0.0
    %314 = vmatpush1.msra.mxu0 0.0
    %315 = vmatprep.subr.mxu0 0.0
    %316 = vmatpush1.msra.mxu0 0.0
    %317 = vmatprep.subr.mxu0 0.0
    %318 = vmatpush1.msra.mxu0 0.0
    %319 = vmatprep.mubr.f32.mxu0 0.0
    %320 = vmatmul.mubr.f32.gmra.mrb[0].mxu0 %v253
    %v321 = vpop.f32.mrb[0].mxu0
    %v322 = vadd.f32 %v249, %v321
    %v323 = vpop.f32.mrb[0].mxu0
    %324 = vdwg.mxu0
    %325 = vst [vmem:[#allocation2] sm:$0x3] %v322
    // Predicated region
    $region30: #{tpu_custom_call.1} parent=1 // pred_check
      _
    $region31: #{tpu_custom_call.1} parent=1 // pred_check_branch
      %327 = sbr.rel (0) target = $region33
    $region32: #{tpu_custom_call.1} parent=1 // pred_region
      %s329 = ssub.s32 32, 32
      %330 = vsyncadd [#allocation3], %s329
      %s332 = sshll.u32 [#allocation2], 4
      %s333 = int_to_ptr.vmem [resolvable:$true] %s332
      %335 = dma.vmem_to_hbm [thread:$0]  %s333, 32, %s7, [#allocation3]
    $region33: #{tpu_custom_call.1} parent=1 // pred_fallthru
      _
    // Predicated region
    $region34: #{tpu_custom_call.1} parent=1 // pred_check
      _
    $region35: #{tpu_custom_call.1} parent=1 // pred_check_branch
      %337 = sbr.rel (0) target = $region37
    $region36: #{tpu_custom_call.1} parent=1 // pred_region
      %338 = dma.done [#allocation3], 32
    $region37: #{tpu_custom_call.1} parent=1 // pred_fallthru
      _
    %339 = vsyncpa [#allocation3], 1

</llo_original>
